<compile_context>
chip_gen: v7x
topology: tpu7x:2x2x1
jax: 0.10.0
libtpu: 0.0.40
codegen_flags: <defaults>
</compile_context>

<pallas_src>
import functools

import jax
import jax.numpy as jnp
from jax import lax
from jax.experimental import pallas as pl
from jax.experimental.pallas import tpu as pltpu


def _dot_xwT(x_tile, w_tile):
    # x_tile: (tm, tk), w_tile: (tn, tk) in native nn.Linear layout.
    # Contract the K dims of both -> (tm, tn) == x @ W^T, f32 accumulation.
    return lax.dot_general(
        x_tile,
        w_tile,
        dimension_numbers=(((1,), (1,)), ((), ())),
        preferred_element_type=jnp.float32,
    )


def _linear_kernel_f32_out(x_ref, w_ref, b_ref, o_ref):
    """f32 output: accumulate directly into the resident output block."""
    k = pl.program_id(2)

    @pl.when(k == 0)
    def _():
        o_ref[...] = jnp.zeros_like(o_ref)

    o_ref[...] += _dot_xwT(x_ref[...], w_ref[...])

    @pl.when(k == pl.num_programs(2) - 1)
    def _():
        o_ref[...] += b_ref[...]


def _linear_kernel_acc(x_ref, w_ref, b_ref, o_ref, acc_ref):
    """Non-f32 output: f32 VMEM accumulator, cast on the final K step."""
    k = pl.program_id(2)

    @pl.when(k == 0)
    def _():
        acc_ref[...] = jnp.zeros_like(acc_ref)

    acc_ref[...] += _dot_xwT(x_ref[...], w_ref[...])

    @pl.when(k == pl.num_programs(2) - 1)
    def _():
        o_ref[...] = (acc_ref[...] + b_ref[...]).astype(o_ref.dtype)


def _round_up(x, m):
    return ((x + m - 1) // m) * m


def _sublane_multiple(dtype):
    itemsize = jnp.dtype(dtype).itemsize
    return {4: 8, 2: 16, 1: 32}.get(itemsize, 8)


def _chunk(size, cap, align, min_chunks=1):
    """Split `size` into `n` equal tiles of width <= ~cap, aligned to `align`.

    Returns (tile, padded_size) with padded_size = tile * n >= size and at most
    (align - 1) padding per chunk — no pad-to-tile-multiple blowup.
    """
    n = max(min_chunks, -(-size // cap))  # ceil(size / cap)
    tile = _round_up(-(-size // n), align)
    return tile, tile * n


@functools.partial(jax.jit, static_argnames=("tm_cap", "tn_cap", "tk_cap"))
def multiclass_head(x, weight, bias, *, tm_cap=512, tn_cap=512, tk_cap=1024):
    """Pallas equivalent of MulticlassHead.forward: x @ weight.T + bias.

    Args:
      x:      [..., input_size] input activations.
      weight: [num_classes, input_size]  (native PyTorch nn.Linear layout —
              NOT transposed in the wrapper).
      bias:   [num_classes].
    Returns:
      [..., num_classes] logits, same dtype as x.
    """
    *lead, K = x.shape
    N, Kw = weight.shape
    assert K == Kw, "input_size mismatch between x and weight"

    x2 = x.reshape(-1, K)
    M = x2.shape[0]
    out_dtype = x.dtype

    sub_m = _sublane_multiple(x.dtype)
    sub_n = max(_sublane_multiple(weight.dtype), 8)

    # N: collapse to a single lane-dense tile for classifier-head sizes.
    tn, Np = _chunk(N, tn_cap, 128)
    n_chunks = Np // tn
    # M: split into >=2 tiles when the (i, j) grid would otherwise be 1x1 so
    # v7x megacore has two parallel iterations to shard across TensorCores.
    m_min_chunks = 2 if (n_chunks == 1 and M >= 2 * sub_m) else 1
    tm, Mp = _chunk(M, tm_cap, sub_m, min_chunks=m_min_chunks)
    # K: hardware-minimum lane padding; keep the whole reduction in one tile
    # for typical input_size, otherwise even chunks of <= tk_cap.
    tk, Kp = _chunk(K, tk_cap, 128)

    # `tn` is a sublane dim of the weight block — it is a multiple of 128, hence
    # of sub_n, for every supported dtype.
    del sub_n

    # Zero-pad to hardware-aligned extents (zeros along K contribute nothing;
    # padded rows / classes are sliced off at the end).  No transpose.
    xp = x2 if (Mp == M and Kp == K) else jnp.pad(x2, ((0, Mp - M), (0, Kp - K)))
    wp = weight if (Np == N and Kp == K) else jnp.pad(
        weight, ((0, Np - N), (0, Kp - K)))
    bp = (bias if Np == N else jnp.pad(bias, (0, Np - N)))
    bp = bp.astype(jnp.float32).reshape(1, Np)

    grid = (Mp // tm, Np // tn, Kp // tk)

    if out_dtype == jnp.float32:
        kernel = _linear_kernel_f32_out
        scratch_shapes = []
    else:
        kernel = _linear_kernel_acc
        scratch_shapes = [pltpu.VMEM((tm, tn), jnp.float32)]

    out = pl.pallas_call(
        kernel,
        out_shape=jax.ShapeDtypeStruct((Mp, Np), out_dtype),
        grid=grid,
        in_specs=[
            pl.BlockSpec((tm, tk), lambda i, j, k: (i, k)),   # x tile
            pl.BlockSpec((tn, tk), lambda i, j, k: (j, k)),   # W tile (native)
            pl.BlockSpec((1, tn), lambda i, j, k: (0, j)),    # bias tile
        ],
        out_specs=pl.BlockSpec((tm, tn), lambda i, j, k: (i, j)),
        scratch_shapes=scratch_shapes,
        compiler_params=pltpu.CompilerParams(
            dimension_semantics=("parallel", "parallel", "arbitrary"),
        ),
    )(xp, wp, bp)

    return out[:M, :N].reshape(*lead, N)


def _reference(x, weight, bias):
    return (
        jnp.dot(x.astype(jnp.float32), weight.astype(jnp.float32).T)
        + bias.astype(jnp.float32)
    ).astype(x.dtype)


if __name__ == "__main__":
    key = jax.random.PRNGKey(0)

    # Small shapes consistent with the module: batch=2, input_size=32, classes=8.
    B, IN, NC = 2, 32, 8
    k1, k2, k3 = jax.random.split(key, 3)
    x = jax.random.normal(k1, (B, IN), dtype=jnp.float32)
    w = jax.random.normal(k2, (NC, IN), dtype=jnp.float32) * 0.1
    b = jax.random.normal(k3, (NC,), dtype=jnp.float32)

    out = multiclass_head(x, w, b)
    jax.block_until_ready(out)
    assert out.shape == (B, NC)
    assert jnp.allclose(out, _reference(x, w, b), atol=1e-4, rtol=1e-4), \
        "mismatch vs reference (small)"

    # Larger, non-tile-multiple case exercising the multi-tile grid +
    # resident-output accumulation path (minimal padding: 300->304, 640, 136->256).
    B2, IN2, NC2 = 300, 640, 136
    k4, k5, k6 = jax.random.split(jax.random.PRNGKey(1), 3)
    x2 = jax.random.normal(k4, (B2, IN2), dtype=jnp.float32)
    w2 = jax.random.normal(k5, (NC2, IN2), dtype=jnp.float32) * 0.05
    b2 = jax.random.normal(k6, (NC2,), dtype=jnp.float32)

    out2 = multiclass_head(x2, w2, b2)
    jax.block_until_ready(out2)
    assert out2.shape == (B2, NC2)
    assert jnp.allclose(out2, _reference(x2, w2, b2), atol=1e-3, rtol=1e-3), \
        "mismatch vs reference (tiled)"

    # bf16 case: exercises dtype-aware sublane rounding + f32 scratch accumulator.
    xb = x.astype(jnp.bfloat16)
    wb = w.astype(jnp.bfloat16)
    bb = b.astype(jnp.bfloat16)
    out3 = multiclass_head(xb, wb, bb)
    jax.block_until_ready(out3)
    assert out3.shape == (B, NC)
    assert out3.dtype == jnp.bfloat16
    assert jnp.allclose(out3.astype(jnp.float32),
                        _reference(xb, wb, bb).astype(jnp.float32),
                        atol=5e-2, rtol=5e-2), "mismatch vs reference (bf16)"

    print("KERNEL_OK")
</pallas_src>

<mosaic_0001>
module attributes {stable_mosaic.version = 11 : i64} {
  func.func @_linear_kernel_f32_out(%arg0: i32, %arg1: i32, %arg2: i32, %arg3: memref<8x128xf32, #tpu.memory_space<vmem>>, %arg4: memref<128x128xf32, #tpu.memory_space<vmem>>, %arg5: memref<1x128xf32, #tpu.memory_space<vmem>>, %arg6: memref<8x128xf32, #tpu.memory_space<vmem>>) attributes {dimension_semantics = [#tpu.dimension_semantics<parallel>, #tpu.dimension_semantics<parallel>, #tpu.dimension_semantics<arbitrary>], iteration_bounds = array<i64: 1, 1, 1>, scalar_prefetch = 0 : i64, scratch_operands = 0 : i64, tpu.core_type = #tpu.core_type<tc>, window_params = [{transform_indices = @transform_0, window_bounds = array<i64: 8, 128>}, {transform_indices = @transform_1, window_bounds = array<i64: 128, 128>}, {transform_indices = @transform_2, window_bounds = array<i64: 1, 128>}, {transform_indices = @transform_3, window_bounds = array<i64: 8, 128>}]} {
    %c0_i32 = arith.constant 0 : i32
    %0 = arith.cmpi eq, %arg2, %c0_i32 : i32
    %1 = arith.extui %0 : i1 to i32
    %c0_i32_0 = arith.constant 0 : i32
    %2 = arith.cmpi ne, %1, %c0_i32_0 : i32
    scf.if %2 {
      %cst_10 = arith.constant 0.000000e+00 : f32
      %12 = vector.broadcast %cst_10 : f32 to vector<8x128xf32>
      %c0_11 = arith.constant 0 : index
      %c0_12 = arith.constant 0 : index
      %13 = vector.load %arg6[%c0_11, %c0_12] : memref<8x128xf32, #tpu.memory_space<vmem>>, vector<8x128xf32>
      tpu.vector_store %arg6[%c0_11, %c0_12], %12 {strides = array<i32>} : memref<8x128xf32, #tpu.memory_space<vmem>>, vector<8x128xf32>,
    } else {
    }
    %c0 = arith.constant 0 : index
    %c0_1 = arith.constant 0 : index
    %3 = vector.load %arg6[%c0, %c0_1] : memref<8x128xf32, #tpu.memory_space<vmem>>, vector<8x128xf32>
    %c0_2 = arith.constant 0 : index
    %c0_3 = arith.constant 0 : index
    %4 = vector.load %arg3[%c0_2, %c0_3] : memref<8x128xf32, #tpu.memory_space<vmem>>, vector<8x128xf32>
    %c0_4 = arith.constant 0 : index
    %c0_5 = arith.constant 0 : index
    %5 = vector.load %arg4[%c0_4, %c0_5] : memref<128x128xf32, #tpu.memory_space<vmem>>, vector<128x128xf32>
    %cst = arith.constant dense<0.000000e+00> : vector<8x128xf32>
    %6 = tpu.matmul %4, %5, %cst {dimension_numbers = #tpu.dot_dimension_numbers<[1], [1], [0], [0], [0, 0, 1, 0], [], []>} : vector<8x128xf32>, vector<128x128xf32>, vector<8x128xf32> -> vector<8x128xf32>
    %7 = arith.addf %3, %6 : vector<8x128xf32>
    %c0_6 = arith.constant 0 : index
    %c0_7 = arith.constant 0 : index
    %8 = vector.load %arg6[%c0_6, %c0_7] : memref<8x128xf32, #tpu.memory_space<vmem>>, vector<8x128xf32>
    tpu.vector_store %arg6[%c0_6, %c0_7], %7 {strides = array<i32>} : memref<8x128xf32, #tpu.memory_space<vmem>>, vector<8x128xf32>,
    %c0_i32_8 = arith.constant 0 : i32
    %9 = arith.cmpi eq, %arg2, %c0_i32_8 : i32
    %10 = arith.extui %9 : i1 to i32
    %c0_i32_9 = arith.constant 0 : i32
    %11 = arith.cmpi ne, %10, %c0_i32_9 : i32
    scf.if %11 {
      %c0_10 = arith.constant 0 : index
      %c0_11 = arith.constant 0 : index
      %12 = vector.load %arg6[%c0_10, %c0_11] : memref<8x128xf32, #tpu.memory_space<vmem>>, vector<8x128xf32>
      %c0_12 = arith.constant 0 : index
      %c0_13 = arith.constant 0 : index
      %13 = vector.load %arg5[%c0_12, %c0_13] : memref<1x128xf32, #tpu.memory_space<vmem>>, vector<1x128xf32>
      %14 = vector.broadcast %13 : vector<1x128xf32> to vector<8x128xf32>
      %15 = arith.addf %12, %14 : vector<8x128xf32>
      %c0_14 = arith.constant 0 : index
      %c0_15 = arith.constant 0 : index
      %16 = vector.load %arg6[%c0_14, %c0_15] : memref<8x128xf32, #tpu.memory_space<vmem>>, vector<8x128xf32>
      tpu.vector_store %arg6[%c0_14, %c0_15], %15 {strides = array<i32>} : memref<8x128xf32, #tpu.memory_space<vmem>>, vector<8x128xf32>,
    } else {
    }
    return
  }
  func.func @transform_0(%arg0: i32, %arg1: i32, %arg2: i32) -> (i32, i32) {
    %c0_i32 = arith.constant 0 : i32
    return %arg0, %arg2 : i32, i32
  }
  func.func @transform_1(%arg0: i32, %arg1: i32, %arg2: i32) -> (i32, i32) {
    %c0_i32 = arith.constant 0 : i32
    return %arg1, %arg2 : i32, i32
  }
  func.func @transform_2(%arg0: i32, %arg1: i32, %arg2: i32) -> (i32, i32) {
    %c0_i32 = arith.constant 0 : i32
    %c0_i32_0 = arith.constant 0 : i32
    return %c0_i32, %arg1 : i32, i32
  }
  func.func @transform_3(%arg0: i32, %arg1: i32, %arg2: i32) -> (i32, i32) {
    %c0_i32 = arith.constant 0 : i32
    return %arg0, %arg1 : i32, i32
  }
}

</mosaic_0001>

<llo_original>
// kernel: multiclass_head.1
$region0: #{multiclass_head.1}
  #allocation0 [shape = 'u32[]', space=smem, size = 0x4, offset = 0x4, fixed_abs, tag = 'smem constant byte address 0x4 - core index']
  #allocation1 [shape = 'u32[144,128]{1,0:T(1,128)}', space=vmem, size = 0x12000, scoped, tag = 'internal scratch']
  %s0 = inlined_call_operand.vmem [shape: f32[8,128], index: 0, kind: input, shape index: {}]
  %s1 = inlined_call_operand.vmem [shape: f32[128,128], index: 1, kind: input, shape index: {}]
  %s2 = inlined_call_operand.vmem [shape: f32[1,128], index: 2, kind: input, shape index: {}]
  %s3 = inlined_call_operand.vmem [shape: f32[8,128], index: 3, kind: output, shape index: {}]
  %s4 = sld [smem:[#allocation0]]
  $region30: #{multiclass_head.1} parent=0
    _
  %s6 = ssub.s32 1, %s4
  %s7 = scalar_select 0, %s6, %s4
  // Predicated region
  $region2: #{multiclass_head.1} parent=0 // pred_check
    _
  $region3: #{multiclass_head.1} parent=0 // pred_check_branch
    %9 = sbr.rel (0) target = $region5
  $region4: #{multiclass_head.1} parent=0 // pred_region
    _
  $region5: #{multiclass_head.1} parent=0 // pred_fallthru
    _
  // Predicated region
  $region6: #{multiclass_head.1} parent=0 // pred_check
    _
  $region7: #{multiclass_head.1} parent=0 // pred_check_branch
    %11 = sbr.rel (0) target = $region9
  $region8: #{multiclass_head.1} parent=0 // pred_region
    _
  $region9: #{multiclass_head.1} parent=0 // pred_fallthru
    _
  // Predicated region
  $region10: #{multiclass_head.1} parent=0 // pred_check
    _
  $region11: #{multiclass_head.1} parent=0 // pred_check_branch
    %13 = sbr.rel (0) target = $region13
  $region12: #{multiclass_head.1} parent=0 // pred_region
    _
  $region13: #{multiclass_head.1} parent=0 // pred_fallthru
    _
  %p14 = scmp.eq.s32.totalorder 0, 0
  // Predicated region
  $region14: #{multiclass_head.1} parent=0 // pred_check
    %p15 = pneg %p14
  $region15: #{multiclass_head.1} parent=0 // pred_check_branch
    %17 = sbr.rel (%p15) target = $region17
  $region16: #{multiclass_head.1} parent=0 // pred_region
    %18 = vst [vmem:[%s3] sm:$0xff] 0.0
  $region17: #{multiclass_head.1} parent=0 // pred_fallthru
    _
  %v19 = vld [vmem:[%s3] sm:$0xff]
  %v20 = vld [vmem:[%s0] sm:$0xff]
  %v21 = vld [vmem:[%s1] sm:$0xff]
  %v22 = vld [vmem:[%s1 + $0x8] sm:$0xff]
  %v23 = vld [vmem:[%s1 + $0x10] sm:$0xff]
  %v24 = vld [vmem:[%s1 + $0x18] sm:$0xff]
  %v25 = vld [vmem:[%s1 + $0x20] sm:$0xff]
  %v26 = vld [vmem:[%s1 + $0x28] sm:$0xff]
  %v27 = vld [vmem:[%s1 + $0x30] sm:$0xff]
  %v28 = vld [vmem:[%s1 + $0x38] sm:$0xff]
  %v29 = vld [vmem:[%s1 + $0x40] sm:$0xff]
  %v30 = vld [vmem:[%s1 + $0x48] sm:$0xff]
  %v31 = vld [vmem:[%s1 + $0x50] sm:$0xff]
  %v32 = vld [vmem:[%s1 + $0x58] sm:$0xff]
  %v33 = vld [vmem:[%s1 + $0x60] sm:$0xff]
  %v34 = vld [vmem:[%s1 + $0x68] sm:$0xff]
  %v35 = vld [vmem:[%s1 + $0x70] sm:$0xff]
  %v36 = vld [vmem:[%s1 + $0x78] sm:$0xff]
  %37 = vmatprep.subr.mxu0 0.0
  %38 = vmatpush1.xpose.msra.mxu0 %v21
  %39 = vmatprep.subr.mxu0 0.0
  %40 = vmatpush1.xpose.msra.mxu0 %v22
  %41 = vmatprep.subr.mxu0 0.0
  %42 = vmatpush1.xpose.msra.mxu0 %v23
  %43 = vmatprep.subr.mxu0 0.0
  %44 = vmatpush1.xpose.msra.mxu0 %v24
  %45 = vmatprep.subr.mxu0 0.0
  %46 = vmatpush1.xpose.msra.mxu0 %v25
  %47 = vmatprep.subr.mxu0 0.0
  %48 = vmatpush1.xpose.msra.mxu0 %v26
  %49 = vmatprep.subr.mxu0 0.0
  %50 = vmatpush1.xpose.msra.mxu0 %v27
  %51 = vmatprep.subr.mxu0 0.0
  %52 = vmatpush1.xpose.msra.mxu0 %v28
  %53 = vmatprep.subr.mxu0 0.0
  %54 = vmatpush1.xpose.msra.mxu0 %v29
  %55 = vmatprep.subr.mxu0 0.0
  %56 = vmatpush1.xpose.msra.mxu0 %v30
  %57 = vmatprep.subr.mxu0 0.0
  %58 = vmatpush1.xpose.msra.mxu0 %v31
  %59 = vmatprep.subr.mxu0 0.0
  %60 = vmatpush1.xpose.msra.mxu0 %v32
  %61 = vmatprep.subr.mxu0 0.0
  %62 = vmatpush1.xpose.msra.mxu0 %v33
  %63 = vmatprep.subr.mxu0 0.0
  %64 = vmatpush1.xpose.msra.mxu0 %v34
  %65 = vmatprep.subr.mxu0 0.0
  %66 = vmatpush1.xpose.msra.mxu0 %v35
  %67 = vmatprep.subr.mxu0 0.0
  %68 = vmatpush1.xpose.msra.mxu0 %v36
  %69 = vmatprep.subr.mxu0 0.0
  %70 = vmatpush1.xpose.msra.mxu0 0.0
  %71 = vmatprep.subr.mxu0 0.0
  %72 = vmatpush1.xpose.msra.mxu0 0.0
  %73 = vmatprep.subr.mxu0 0.0
  %74 = vmatpush1.xpose.msra.mxu0 0.0
  %75 = vmatprep.subr.mxu0 0.0
  %76 = vmatpush1.xpose.msra.mxu0 0.0
  %77 = vmatprep.subr.mxu0 0.0
  %78 = vmatpush1.xpose.msra.mxu0 0.0
  %79 = vmatprep.subr.mxu0 0.0
  %80 = vmatpush1.xpose.msra.mxu0 0.0
  %81 = vmatprep.subr.mxu0 0.0
  %82 = vmatpush1.xpose.msra.mxu0 0.0
  %83 = vmatprep.subr.mxu0 0.0
  %84 = vmatpush1.xpose.msra.mxu0 0.0
  %85 = vmatprep.subr.mxu0 0.0
  %86 = vmatpush1.xpose.msra.mxu0 0.0
  %87 = vmatprep.subr.mxu0 0.0
  %88 = vmatpush1.xpose.msra.mxu0 0.0
  %89 = vmatprep.subr.mxu0 0.0
  %90 = vmatpush1.xpose.msra.mxu0 0.0
  %91 = vmatprep.subr.mxu0 0.0
  %92 = vmatpush1.xpose.msra.mxu0 0.0
  %93 = vmatprep.subr.mxu0 0.0
  %94 = vmatpush1.xpose.msra.mxu0 0.0
  %95 = vmatprep.subr.mxu0 0.0
  %96 = vmatpush1.xpose.msra.mxu0 0.0
  %97 = vmatprep.subr.mxu0 0.0
  %98 = vmatpush1.xpose.msra.mxu0 0.0
  %99 = vmatprep.subr.mxu0 0.0
  %100 = vmatpush1.xpose.msra.mxu0 0.0
  %101 = vmatprep.mubr.f32.mxu0 0.0
  %102 = vmatmul.mubr.f32.gmra.mrb[0].mxu0 %v20
  %v103 = vpop.f32.mrb[0].mxu0
  %v104 = vadd.f32 0.0, %v103
  %v105 = vpop.f32.mrb[0].mxu0
  %106 = vdwg.mxu0
  %v107 = vadd.f32 %v19, %v104
  %108 = vst [vmem:[%s3] sm:$0xff] %v107
  // Predicated region
  $region18: #{multiclass_head.1} parent=0 // pred_check
    %p109 = pneg %p14
  $region19: #{multiclass_head.1} parent=0 // pred_check_branch
    %111 = sbr.rel (%p109) target = $region21
  $region20: #{multiclass_head.1} parent=0 // pred_region
    %v112 = vld [vmem:[%s3] sm:$0xff]
    %v113 = vld [vmem:[%s2] sm:$0x1]
    %v115 = vlaneseq
    %v116 = vshrl.u32 %v115, 7
    %v117 = vsub.s32 0, %v116
    %v118 = vrot.slane %v113, %v117
    %v120 = vadd.f32 %v112, %v118
    %121 = vst [vmem:[%s3] sm:$0xff] %v120
  $region21: #{multiclass_head.1} parent=0 // pred_fallthru
    _
  // Predicated region
  $region22: #{multiclass_head.1} parent=0 // pred_check
    _
  $region23: #{multiclass_head.1} parent=0 // pred_check_branch
    %123 = sbr.rel (0) target = $region25
  $region24: #{multiclass_head.1} parent=0 // pred_region
    _
  $region25: #{multiclass_head.1} parent=0 // pred_fallthru
    _
  // Predicated region
  $region26: #{multiclass_head.1} parent=0 // pred_check
    _
  $region27: #{multiclass_head.1} parent=0 // pred_check_branch
    %125 = sbr.rel (0) target = $region29
  $region28: #{multiclass_head.1} parent=0 // pred_region
    _
  $region29: #{multiclass_head.1} parent=0 // pred_fallthru
    _

</llo_original>
